<compile_context>
chip_gen: v7x
topology: tpu7x:2x2x1
jax: 0.10.0
libtpu: 0.0.40
codegen_flags: <defaults>
</compile_context>

<pallas_src>
import jax
import jax.numpy as jnp
from jax.experimental import pallas as pl
from jax.experimental.pallas import tpu as pltpu

K = 3        # MaxPool2d(kernel_size=3) -> stride defaults to kernel_size = 3
LANE = 128   # TPU lane width
SUBLANE = 8  # TPU sublane width


def _round_up(a, b):
    return -(-a // b) * b


def _maxpool_kh_kernel(x_ref, o_ref):
    """Max over the leading kh-tap axis.

    x_ref: (K, TILE_OH, TILE_L)  -- combined (ow, N, C) lanes, width already reduced
    o_ref: (TILE_OH, TILE_L)
    """
    acc = x_ref[0]
    for kh in range(1, K):
        acc = jnp.maximum(acc, x_ref[kh])
    o_ref[...] = acc


def maxpool2d_ceil(x):
    """MaxPool2d(kernel_size=3, stride=3, ceil_mode=True) for NCHW input."""
    N, C, H, W = x.shape
    oh = -(-H // K)          # ceil(H / K)
    ow = -(-W // K)          # ceil(W / K)
    hp, wp = oh * K, ow * K
    nc = N * C

    if jnp.issubdtype(x.dtype, jnp.floating):
        pad_val = -jnp.inf
    else:
        pad_val = jnp.iinfo(x.dtype).min

    # ---- XLA prologue (bandwidth-minimizing) --------------------------------
    # 1) ceil_mode pad (at most K-1 rows/cols of the max-identity value).
    xw = jnp.pad(x, ((0, 0), (0, 0), (0, hp - H), (0, wp - W)),
                 constant_values=pad_val)
    # 2) Reduce the kw taps here (fuses with the pad) -> X/3 bytes downstream.
    xw = xw.reshape(N, C, hp, ow, K).max(axis=-1)              # (N, C, hp, ow)
    # 3) Split rows into (oh, kh); put (ow, N, C) on the combined lane axis so
    #    loads/stores stay lane-dense even when N*C < 128.
    xw = xw.reshape(N, C, oh, K, ow)
    xw = jnp.transpose(xw, (3, 2, 4, 0, 1)).reshape(K, oh, ow * nc)
    lane = ow * nc
    lane_pad = _round_up(lane, LANE)
    if lane_pad != lane:
        # Padded lanes never mix with real lanes (max is elementwise over kh);
        # they are sliced off after the kernel.
        xw = jnp.pad(xw, ((0, 0), (0, 0), (0, lane_pad - lane)),
                     constant_values=pad_val)

    # ---- tile sizes ----------------------------------------------------------
    itembytes = jnp.dtype(x.dtype).itemsize
    in_budget = 8 * 1024 * 1024      # per input block; double-buffered in+out ~22 MiB

    min_rows = oh if oh <= SUBLANE else SUBLANE
    tile_l = lane_pad
    if K * min_rows * tile_l * itembytes > in_budget:
        # Very wide images: tile the lane axis too (multiples of 128).
        tile_l = max(LANE,
                     (in_budget // (K * min_rows * itembytes)) // LANE * LANE)
    rows_fit = in_budget // (K * tile_l * itembytes)
    if rows_fit >= oh:
        tile_oh = oh
    else:
        tile_oh = max(SUBLANE, rows_fit // SUBLANE * SUBLANE)

    # Ensure >= 2 parallel grid steps on medium/large problems (v7x: 2 TCs).
    if (pl.cdiv(oh, tile_oh) * pl.cdiv(lane_pad, tile_l) == 1
            and oh * lane_pad * itembytes >= (1 << 20)):
        if oh > SUBLANE:
            tile_oh = _round_up(pl.cdiv(oh, 2), SUBLANE)
        elif lane_pad > LANE:
            tile_l = pl.cdiv(lane_pad // LANE, 2) * LANE

    grid = (pl.cdiv(oh, tile_oh), pl.cdiv(lane_pad, tile_l))

    out = pl.pallas_call(
        _maxpool_kh_kernel,
        out_shape=jax.ShapeDtypeStruct((oh, lane_pad), x.dtype),
        grid=grid,
        in_specs=[pl.BlockSpec((K, tile_oh, tile_l), lambda i, j: (0, i, j))],
        out_specs=pl.BlockSpec((tile_oh, tile_l), lambda i, j: (i, j)),
        compiler_params=pltpu.CompilerParams(
            dimension_semantics=("parallel", "parallel"),
            vmem_limit_bytes=48 * 1024 * 1024),
    )(xw)

    # ---- back to NCHW --------------------------------------------------------
    # TODO(synk): if the consumer accepts channels-last (oh, ow, N, C) output,
    # this small un-transpose (extra read+write of X/9 bytes) can be dropped.
    out = out[:, :lane].reshape(oh, ow, N, C)
    return jnp.transpose(out, (2, 3, 0, 1))


if __name__ == "__main__":
    key = jax.random.PRNGKey(0)
    # Small NCHW input consistent with the module's forward.
    x = jax.random.normal(key, (2, 4, 16, 16), dtype=jnp.float32)

    y = jax.block_until_ready(jax.jit(maxpool2d_ceil)(x))

    # Pure-JAX reference with identical ceil_mode semantics.
    N, C, H, W = x.shape
    oh, ow = -(-H // K), -(-W // K)
    ref = jax.lax.reduce_window(
        x, -jnp.inf, jax.lax.max,
        window_dimensions=(1, 1, K, K),
        window_strides=(1, 1, K, K),
        padding=((0, 0), (0, 0), (0, oh * K - H), (0, ow * K - W)),
    )

    assert y.shape == (N, C, oh, ow), y.shape
    assert jnp.allclose(y, ref), "mismatch vs reference"
    print("KERNEL_OK")
</pallas_src>

<mosaic_0001>
module attributes {stable_mosaic.version = 11 : i64} {
  func.func @_maxpool_kh_kernel(%arg0: i32, %arg1: i32, %arg2: memref<3x6x128xf32, #tpu.memory_space<vmem>>, %arg3: memref<6x128xf32, #tpu.memory_space<vmem>>) attributes {dimension_semantics = [#tpu.dimension_semantics<parallel>, #tpu.dimension_semantics<parallel>], iteration_bounds = array<i64: 1, 1>, scalar_prefetch = 0 : i64, scratch_operands = 0 : i64, tpu.core_type = #tpu.core_type<tc>, window_params = [{transform_indices = @transform_0, window_bounds = array<i64: 3, 6, 128>}, {transform_indices = @transform_1, window_bounds = array<i64: 6, 128>}]} {
    %c0 = arith.constant 0 : index
    %c0_0 = arith.constant 0 : index
    %c0_1 = arith.constant 0 : index
    %0 = vector.load %arg2[%c0, %c0_0, %c0_1] : memref<3x6x128xf32, #tpu.memory_space<vmem>>, vector<1x6x128xf32>
    %1 = vector.shape_cast %0 : vector<1x6x128xf32> to vector<6x128xf32>
    %c1 = arith.constant 1 : index
    %c0_2 = arith.constant 0 : index
    %c0_3 = arith.constant 0 : index
    %2 = vector.load %arg2[%c1, %c0_2, %c0_3] : memref<3x6x128xf32, #tpu.memory_space<vmem>>, vector<1x6x128xf32>
    %3 = vector.shape_cast %2 : vector<1x6x128xf32> to vector<6x128xf32>
    %4 = arith.maximumf %1, %3 : vector<6x128xf32>
    %c2 = arith.constant 2 : index
    %c0_4 = arith.constant 0 : index
    %c0_5 = arith.constant 0 : index
    %5 = vector.load %arg2[%c2, %c0_4, %c0_5] : memref<3x6x128xf32, #tpu.memory_space<vmem>>, vector<1x6x128xf32>
    %6 = vector.shape_cast %5 : vector<1x6x128xf32> to vector<6x128xf32>
    %7 = arith.maximumf %4, %6 : vector<6x128xf32>
    %c0_6 = arith.constant 0 : index
    %c0_7 = arith.constant 0 : index
    %8 = vector.load %arg3[%c0_6, %c0_7] : memref<6x128xf32, #tpu.memory_space<vmem>>, vector<6x128xf32>
    tpu.vector_store %arg3[%c0_6, %c0_7], %7 {strides = array<i32>} : memref<6x128xf32, #tpu.memory_space<vmem>>, vector<6x128xf32>,
    return
  }
  func.func @transform_0(%arg0: i32, %arg1: i32) -> (i32, i32, i32) {
    %c0_i32 = arith.constant 0 : i32
    %c0_i32_0 = arith.constant 0 : i32
    return %c0_i32, %arg0, %arg1 : i32, i32, i32
  }
  func.func @transform_1(%arg0: i32, %arg1: i32) -> (i32, i32) {
    %c0_i32 = arith.constant 0 : i32
    return %arg0, %arg1 : i32, i32
  }
}

</mosaic_0001>

<llo_original>
// kernel: maxpool2d_ceil.1
$region0: #{maxpool2d_ceil.1}
  #allocation0 [shape = 'u32[]', space=smem, size = 0x4, offset = 0x4, fixed_abs, tag = 'smem constant byte address 0x4 - core index']
  #allocation1 [shape = 'u32[144,128]{1,0:T(1,128)}', space=vmem, size = 0x12000, scoped, tag = 'internal scratch']
  %s0 = inlined_call_operand.vmem [shape: f32[3,6,128], index: 0, kind: input, shape index: {}]
  %s1 = inlined_call_operand.vmem [shape: f32[6,128], index: 1, kind: output, shape index: {}]
  %s2 = sld [smem:[#allocation0]]
  $region14: #{maxpool2d_ceil.1} parent=0
    _
  %s4 = ssub.s32 1, %s2
  %s5 = scalar_select 0, %s4, %s2
  // Predicated region
  $region2: #{maxpool2d_ceil.1} parent=0 // pred_check
    _
  $region3: #{maxpool2d_ceil.1} parent=0 // pred_check_branch
    %7 = sbr.rel (0) target = $region5
  $region4: #{maxpool2d_ceil.1} parent=0 // pred_region
    _
  $region5: #{maxpool2d_ceil.1} parent=0 // pred_fallthru
    _
  %v8 = vld [vmem:[%s0] sm:$0x3f]
  %s9 = scalar_lea.vmem %s0, 8
  %v10 = vld [vmem:[%s9] sm:$0x3f]
  %v11 = vmax.f32 %v8, %v10
  %s12 = scalar_lea.vmem %s0, 16
  %v13 = vld [vmem:[%s12] sm:$0x3f]
  %v14 = vmax.f32 %v11, %v13
  %15 = vst [vmem:[%s1] sm:$0x3f] %v14
  // Predicated region
  $region6: #{maxpool2d_ceil.1} parent=0 // pred_check
    _
  $region7: #{maxpool2d_ceil.1} parent=0 // pred_check_branch
    %17 = sbr.rel (0) target = $region9
  $region8: #{maxpool2d_ceil.1} parent=0 // pred_region
    _
  $region9: #{maxpool2d_ceil.1} parent=0 // pred_fallthru
    _
  // Predicated region
  $region10: #{maxpool2d_ceil.1} parent=0 // pred_check
    _
  $region11: #{maxpool2d_ceil.1} parent=0 // pred_check_branch
    %19 = sbr.rel (0) target = $region13
  $region12: #{maxpool2d_ceil.1} parent=0 // pred_region
    _
  $region13: #{maxpool2d_ceil.1} parent=0 // pred_fallthru
    _

</llo_original>
